<compile_context>
chip_gen: v7x
topology: tpu7x:2x2x1
jax: 0.10.0
libtpu: 0.0.40
codegen_flags: <defaults>
</compile_context>

<pallas_src>
import jax
import jax.numpy as jnp
from jax.experimental import pallas as pl
from jax.experimental.pallas import tpu as pltpu


LANE = 128  # TPU lane width; features are padded to this inside the kernel.


# ------------------------------------------------------------------ kernel ---
def make_encoder_kernel(n_layers, dim_x, dim_z, kappa_upscale, kappa_add,
                        use_bf16_matmul=False):
    """Builds the fused encoder kernel with compile-time constants closed over."""

    def kernel(x_ref, w_ref, b_ref, out_ref, xpad_ref):
        # x_ref:    [TB, dim_x]        raw (un-padded) input rows
        # w_ref:    [L, LANE, LANE]    fused (mu || kappa) block-diagonal weights
        # b_ref:    [L, 1, LANE]       fused biases (f32)
        # out_ref:  [TB, LANE]         mu in lanes 0..dim_z-1, kappa in lane dim_z
        # xpad_ref: [TB, LANE] VMEM    scratch used to lane-pad x on-chip
        #
        # Lane-pad x in VMEM (zero every step: with a "parallel" grid each TC has
        # its own scratch, so a one-time init gated on program_id would be unsafe).
        xpad_ref[...] = jnp.zeros_like(xpad_ref)
        xpad_ref[:, :dim_x] = x_ref[...]
        h = xpad_ref[...]

        for l in range(n_layers):
            w = w_ref[l]
            if use_bf16_matmul:
                acc = jnp.dot(h.astype(jnp.bfloat16), w,
                              preferred_element_type=jnp.float32)
            else:
                acc = jnp.dot(h, w, preferred_element_type=jnp.float32)
            h = acc + b_ref[l]
            if l < n_layers - 1:
                h = jnp.maximum(h, 0.0)

        # lane index -> which columns hold mu vs kappa vs padding.
        lane = jax.lax.broadcasted_iota(jnp.int32, h.shape, 1)
        mu_mask = lane < dim_z
        kappa_mask = lane == dim_z

        # ---- mu = mu / ||mu||  (masked sum keeps the reduction exact despite padding).
        # Matches torch mu / torch.norm(mu): no epsilon -> all-zero mu row gives NaN.
        mu = jnp.where(mu_mask, h, 0.0)
        ss = jnp.sum(mu * mu, axis=-1, keepdims=True)
        mu_n = mu * jax.lax.rsqrt(ss)

        # ---- kappa = exp(upscale * softplus(k) + add), stable softplus (log1p).
        # Only the kappa lane keeps its pre-activation; others are masked to 0 so
        # no inf/NaN shows up even in discarded temporaries.
        hk = jnp.where(kappa_mask, h, 0.0)
        sp = jnp.maximum(hk, 0.0) + jnp.log1p(jnp.exp(-jnp.abs(hk)))
        kappa = jnp.exp(kappa_upscale * sp + kappa_add)

        out_ref[...] = jnp.where(kappa_mask, kappa, mu_n)

    return kernel


# ------------------------------------------------------------- param pack ----
def pack_fused_params(mu_layers, kappa_layers, lane_width=LANE):
    """Pack the two MLPs into one block-diagonal weight slab + one bias slab.

    mu_layers / kappa_layers: lists of (W [in,out], b [1,out]) tuples, same length.
    Returns W_slab [L, lane, lane] and B_slab [L, 1, lane] (f32, zero padded).
    """
    assert len(mu_layers) == len(kappa_layers)
    L = len(mu_layers)
    W = jnp.zeros((L, lane_width, lane_width), jnp.float32)
    B = jnp.zeros((L, 1, lane_width), jnp.float32)
    for l in range(L):
        mw, mb = mu_layers[l]
        kw, kb = kappa_layers[l]
        # mu block: rows 0.., cols 0..
        W = W.at[l, : mw.shape[0], : mw.shape[1]].set(mw)
        B = B.at[l, 0, : mb.shape[1]].set(mb[0])
        # kappa block: shares the x rows at layer 0, block-diagonal afterwards.
        k_in_off = 0 if l == 0 else mw.shape[0]
        k_out_off = mw.shape[1]
        assert k_in_off + kw.shape[0] <= lane_width
        assert k_out_off + kw.shape[1] <= lane_width
        W = W.at[l, k_in_off : k_in_off + kw.shape[0],
                 k_out_off : k_out_off + kw.shape[1]].set(kw)
        B = B.at[l, 0, k_out_off : k_out_off + kb.shape[1]].set(kb[0])
    return W, B


# --------------------------------------------------------------- wrapper -----
def encoder_forward(x, mu_layers, kappa_layers, kappa_upscale, kappa_add,
                    batch_tile=None, use_bf16_matmul=False):
    """Fused Encoder forward.  Returns (mu [B, dim_z], kappa [B, 1]).

    batch_tile=None  -> single grid step (best on single-TC v5e/v6e and for any
                        batch whose x/out slabs fit VMEM - tens of thousands of rows).
    batch_tile=TB    -> grid over the batch axis.  Use TB >= 512 (ideally 1024-2048)
                        and pick TB so Bp//TB is even and >= 2 to shard the
                        "parallel" axis across v7x's two TensorCores.  TB % 8 == 0.
    use_bf16_matmul  -> bf16 MXU operands, f32 accumulate (good on v5e; loosens
                        mu accuracy below the 1e-5 self-test tolerance).
    """
    B, dim_x = x.shape
    dim_z = mu_layers[-1][0].shape[1]
    L = len(mu_layers)
    assert dim_x <= LANE and dim_z + 1 <= LANE
    assert mu_layers[0][0].shape[1] + kappa_layers[0][0].shape[1] <= LANE

    W_slab, B_slab = pack_fused_params(mu_layers, kappa_layers, LANE)
    if use_bf16_matmul:
        W_slab = W_slab.astype(jnp.bfloat16)  # halves the resident weight DMA

    if batch_tile is None:
        TB = B
        Bp = B
    else:
        assert batch_tile % 8 == 0
        TB = batch_tile
        Bp = pl.cdiv(B, TB) * TB

    # No lane padding in the wrapper any more: only a (rare) row pad when the
    # batch doesn't divide the tile.  Padded rows produce NaN mu (ss == 0) and
    # are sliced away below.
    x_in = x.astype(jnp.float32)
    if Bp != B:
        x_in = jnp.pad(x_in, ((0, Bp - B), (0, 0)))

    kernel = make_encoder_kernel(L, dim_x, dim_z,
                                 float(kappa_upscale), float(kappa_add),
                                 use_bf16_matmul=use_bf16_matmul)

    out = pl.pallas_call(
        kernel,
        out_shape=jax.ShapeDtypeStruct((Bp, LANE), jnp.float32),
        grid=(Bp // TB,),
        in_specs=[
            pl.BlockSpec((TB, dim_x), lambda i: (i, 0)),         # raw x tile
            pl.BlockSpec((L, LANE, LANE), lambda i: (0, 0, 0)),  # fused weights (resident)
            pl.BlockSpec((L, 1, LANE), lambda i: (0, 0, 0)),     # fused biases  (resident)
        ],
        out_specs=pl.BlockSpec((TB, LANE), lambda i: (i, 0)),    # lane-dense packed out
        scratch_shapes=[pltpu.VMEM((TB, LANE), jnp.float32)],    # on-chip lane pad of x
        compiler_params=pltpu.CompilerParams(
            dimension_semantics=("parallel",)),
    )(x_in, W_slab, B_slab)

    mu = out[:B, :dim_z]
    kappa = out[:B, dim_z:dim_z + 1]
    return mu, kappa


# ------------------------------------------------------------- init / ref ----
def init_linear(key, din, dout):
    # Deterministic PyTorch-style uniform(-1/sqrt(din), 1/sqrt(din)) init.
    kw, kb = jax.random.split(key)
    lim = 1.0 / float(jnp.sqrt(jnp.float32(din)))
    w = jax.random.uniform(kw, (din, dout), jnp.float32, -lim, lim)
    b = jax.random.uniform(kb, (1, dout), jnp.float32, -lim, lim)
    return w, b


def init_mlp(key, n_hidden, dim_in, dim_out, dim_hidden):
    dims = [dim_in] + [dim_hidden] * n_hidden + [dim_out]
    keys = jax.random.split(key, len(dims) - 1)
    return [init_linear(k, dims[i], dims[i + 1]) for i, k in enumerate(keys)]


def mlp_ref(x, layers):
    h = x
    for i, (w, b) in enumerate(layers):
        h = h @ w + b
        if i < len(layers) - 1:
            h = jnp.maximum(h, 0.0)
    return h


# ------------------------------------------------------------------ main -----
if __name__ == "__main__":
    n_hidden, dim_x, dim_z, dim_hidden = 2, 10, 2, 32
    post_kappa_min, post_kappa_max = 20.0, 80.0

    root = jax.random.PRNGKey(0)
    k_mu, k_kappa, k_x, k_samp, k_x2 = jax.random.split(root, 5)

    mu_layers = init_mlp(k_mu, n_hidden, dim_x, dim_z, dim_hidden)
    kappa_layers = init_mlp(k_kappa, n_hidden, dim_x, 1, dim_hidden)

    # --- _rescale_kappa (init-time glue, plain JAX; mirrors torch.no_grad() block) ---
    x_samples = jax.random.normal(k_samp, (64, dim_x), jnp.float32)
    kappa_samples = jnp.log(1.0 + jnp.exp(mlp_ref(x_samples, kappa_layers)))
    s_min, s_max = jnp.min(kappa_samples), jnp.max(kappa_samples)
    kappa_upscale = float((jnp.log(post_kappa_max) - jnp.log(post_kappa_min))
                          / (s_max - s_min))
    kappa_add = float(jnp.log(post_kappa_max) - kappa_upscale * s_max)

    def ref_forward(xr):
        mu_r = mlp_ref(xr, mu_layers)
        mu_r = mu_r / jnp.linalg.norm(mu_r, axis=-1, keepdims=True)
        kappa_r = jnp.exp(kappa_upscale
                          * jnp.log(1.0 + jnp.exp(mlp_ref(xr, kappa_layers)))
                          + kappa_add)
        return mu_r, kappa_r

    # --- small batch: single fused kernel step (no grid overhead) ---
    B1 = 8
    x1 = jax.random.normal(k_x, (B1, dim_x), jnp.float32)
    mu1, kappa1 = jax.block_until_ready(
        encoder_forward(x1, mu_layers, kappa_layers, kappa_upscale, kappa_add))
    mu1_r, kappa1_r = ref_forward(x1)
    assert mu1.shape == (B1, dim_z) and kappa1.shape == (B1, 1)
    assert jnp.allclose(mu1, mu1_r, atol=1e-5, rtol=1e-5)
    assert jnp.allclose(kappa1, kappa1_r, atol=1e-3, rtol=1e-3)

    # --- larger batch: big tile (>=512) + even 2-step parallel grid (v7x dual-TC path) ---
    B2 = 2048
    x2 = jax.random.normal(k_x2, (B2, dim_x), jnp.float32)
    mu2, kappa2 = jax.block_until_ready(
        encoder_forward(x2, mu_layers, kappa_layers, kappa_upscale, kappa_add,
                        batch_tile=1024))
    mu2_r, kappa2_r = ref_forward(x2)
    assert mu2.shape == (B2, dim_z) and kappa2.shape == (B2, 1)
    assert jnp.allclose(mu2, mu2_r, atol=1e-5, rtol=1e-5)
    assert jnp.allclose(kappa2, kappa2_r, atol=1e-3, rtol=1e-3)

    print("KERNEL_OK")
</pallas_src>

<mosaic_0001>
module attributes {stable_mosaic.version = 11 : i64} {
  func.func @kernel(%arg0: i32, %arg1: memref<8x10xf32, #tpu.memory_space<vmem>>, %arg2: memref<3x128x128xf32, #tpu.memory_space<vmem>>, %arg3: memref<3x1x128xf32, #tpu.memory_space<vmem>>, %arg4: memref<8x128xf32, #tpu.memory_space<vmem>>, %arg5: memref<8x128xf32, #tpu.memory_space<vmem>>) attributes {dimension_semantics = [#tpu.dimension_semantics<parallel>], iteration_bounds = array<i64: 1>, scalar_prefetch = 0 : i64, scratch_operands = 1 : i64, tpu.core_type = #tpu.core_type<tc>, window_params = [{transform_indices = @transform_0, window_bounds = array<i64: 8, 10>}, {pipeline_mode = #tpu.pipeline_mode<synchronous>, transform_indices = @transform_1, window_bounds = array<i64: 3, 128, 128>}, {pipeline_mode = #tpu.pipeline_mode<synchronous>, transform_indices = @transform_2, window_bounds = array<i64: 3, 1, 128>}, {transform_indices = @transform_3, window_bounds = array<i64: 8, 128>}]} {
    %cst = arith.constant 0.000000e+00 : f32
    %0 = vector.broadcast %cst : f32 to vector<8x128xf32>
    %c0 = arith.constant 0 : index
    %c0_0 = arith.constant 0 : index
    %1 = vector.load %arg5[%c0, %c0_0] : memref<8x128xf32, #tpu.memory_space<vmem>>, vector<8x128xf32>
    tpu.vector_store %arg5[%c0, %c0_0], %0 {strides = array<i32>} : memref<8x128xf32, #tpu.memory_space<vmem>>, vector<8x128xf32>,
    %c0_1 = arith.constant 0 : index
    %c0_2 = arith.constant 0 : index
    %2 = vector.load %arg1[%c0_1, %c0_2] : memref<8x10xf32, #tpu.memory_space<vmem>>, vector<8x10xf32>
    %c0_3 = arith.constant 0 : index
    %c0_4 = arith.constant 0 : index
    %3 = vector.load %arg5[%c0_3, %c0_4] : memref<8x128xf32, #tpu.memory_space<vmem>>, vector<8x10xf32>
    tpu.vector_store %arg5[%c0_3, %c0_4], %2 {strides = array<i32>} : memref<8x128xf32, #tpu.memory_space<vmem>>, vector<8x10xf32>,
    %c0_5 = arith.constant 0 : index
    %c0_6 = arith.constant 0 : index
    %4 = vector.load %arg5[%c0_5, %c0_6] : memref<8x128xf32, #tpu.memory_space<vmem>>, vector<8x128xf32>
    %c0_7 = arith.constant 0 : index
    %c0_8 = arith.constant 0 : index
    %c0_9 = arith.constant 0 : index
    %5 = vector.load %arg2[%c0_7, %c0_8, %c0_9] : memref<3x128x128xf32, #tpu.memory_space<vmem>>, vector<1x128x128xf32>
    %6 = vector.shape_cast %5 : vector<1x128x128xf32> to vector<128x128xf32>
    %cst_10 = arith.constant dense<0.000000e+00> : vector<8x128xf32>
    %7 = tpu.matmul %4, %6, %cst_10 {dimension_numbers = #tpu.dot_dimension_numbers<[1], [0], [0], [1], [0, 0, 1, 1], [], []>} : vector<8x128xf32>, vector<128x128xf32>, vector<8x128xf32> -> vector<8x128xf32>
    %c0_11 = arith.constant 0 : index
    %c0_12 = arith.constant 0 : index
    %c0_13 = arith.constant 0 : index
    %8 = vector.load %arg3[%c0_11, %c0_12, %c0_13] : memref<3x1x128xf32, #tpu.memory_space<vmem>>, vector<1x1x128xf32>
    %9 = vector.shape_cast %8 : vector<1x1x128xf32> to vector<1x128xf32>
    %10 = vector.broadcast %9 : vector<1x128xf32> to vector<8x128xf32>
    %11 = arith.addf %7, %10 : vector<8x128xf32>
    %cst_14 = arith.constant 0.000000e+00 : f32
    %12 = vector.broadcast %cst_14 : f32 to vector<8x128xf32>
    %13 = arith.maximumf %11, %12 : vector<8x128xf32>
    %c1 = arith.constant 1 : index
    %c0_15 = arith.constant 0 : index
    %c0_16 = arith.constant 0 : index
    %14 = vector.load %arg2[%c1, %c0_15, %c0_16] : memref<3x128x128xf32, #tpu.memory_space<vmem>>, vector<1x128x128xf32>
    %15 = vector.shape_cast %14 : vector<1x128x128xf32> to vector<128x128xf32>
    %cst_17 = arith.constant dense<0.000000e+00> : vector<8x128xf32>
    %16 = tpu.matmul %13, %15, %cst_17 {dimension_numbers = #tpu.dot_dimension_numbers<[1], [0], [0], [1], [0, 0, 1, 1], [], []>} : vector<8x128xf32>, vector<128x128xf32>, vector<8x128xf32> -> vector<8x128xf32>
    %c1_18 = arith.constant 1 : index
    %c0_19 = arith.constant 0 : index
    %c0_20 = arith.constant 0 : index
    %17 = vector.load %arg3[%c1_18, %c0_19, %c0_20] : memref<3x1x128xf32, #tpu.memory_space<vmem>>, vector<1x1x128xf32>
    %18 = vector.shape_cast %17 : vector<1x1x128xf32> to vector<1x128xf32>
    %19 = vector.broadcast %18 : vector<1x128xf32> to vector<8x128xf32>
    %20 = arith.addf %16, %19 : vector<8x128xf32>
    %cst_21 = arith.constant 0.000000e+00 : f32
    %21 = vector.broadcast %cst_21 : f32 to vector<8x128xf32>
    %22 = arith.maximumf %20, %21 : vector<8x128xf32>
    %c2 = arith.constant 2 : index
    %c0_22 = arith.constant 0 : index
    %c0_23 = arith.constant 0 : index
    %23 = vector.load %arg2[%c2, %c0_22, %c0_23] : memref<3x128x128xf32, #tpu.memory_space<vmem>>, vector<1x128x128xf32>
    %24 = vector.shape_cast %23 : vector<1x128x128xf32> to vector<128x128xf32>
    %cst_24 = arith.constant dense<0.000000e+00> : vector<8x128xf32>
    %25 = tpu.matmul %22, %24, %cst_24 {dimension_numbers = #tpu.dot_dimension_numbers<[1], [0], [0], [1], [0, 0, 1, 1], [], []>} : vector<8x128xf32>, vector<128x128xf32>, vector<8x128xf32> -> vector<8x128xf32>
    %c2_25 = arith.constant 2 : index
    %c0_26 = arith.constant 0 : index
    %c0_27 = arith.constant 0 : index
    %26 = vector.load %arg3[%c2_25, %c0_26, %c0_27] : memref<3x1x128xf32, #tpu.memory_space<vmem>>, vector<1x1x128xf32>
    %27 = vector.shape_cast %26 : vector<1x1x128xf32> to vector<1x128xf32>
    %28 = vector.broadcast %27 : vector<1x128xf32> to vector<8x128xf32>
    %29 = arith.addf %25, %28 : vector<8x128xf32>
    %30 = tpu.iota {dimensions = array<i32: 1>} : vector<8x128xi32>
    %c2_i32 = arith.constant 2 : i32
    %31 = vector.broadcast %c2_i32 : i32 to vector<8x128xi32>
    %32 = arith.cmpi slt, %30, %31 : vector<8x128xi32>
    %c2_i32_28 = arith.constant 2 : i32
    %33 = vector.broadcast %c2_i32_28 : i32 to vector<8x128xi32>
    %34 = arith.cmpi eq, %30, %33 : vector<8x128xi32>
    %cst_29 = arith.constant 0.000000e+00 : f32
    %35 = vector.broadcast %cst_29 : f32 to vector<8x128xf32>
    %36 = arith.select %32, %29, %35 : vector<8x128xi1>, vector<8x128xf32>
    %37 = arith.mulf %36, %36 : vector<8x128xf32>
    %cst_30 = arith.constant dense<0.000000e+00> : vector<8xf32>
    %38 = vector.multi_reduction <add>, %37, %cst_30 [1] : vector<8x128xf32> to vector<8xf32>
    %39 = vector.shape_cast %38 : vector<8xf32> to vector<8x1xf32>
    %40 = math.rsqrt %39 : vector<8x1xf32>
    %41 = vector.broadcast %40 : vector<8x1xf32> to vector<8x128xf32>
    %42 = arith.mulf %36, %41 : vector<8x128xf32>
    %cst_31 = arith.constant 0.000000e+00 : f32
    %43 = vector.broadcast %cst_31 : f32 to vector<8x128xf32>
    %44 = arith.select %34, %29, %43 : vector<8x128xi1>, vector<8x128xf32>
    %cst_32 = arith.constant 0.000000e+00 : f32
    %45 = vector.broadcast %cst_32 : f32 to vector<8x128xf32>
    %46 = arith.maximumf %44, %45 : vector<8x128xf32>
    %47 = math.absf %44 : vector<8x128xf32>
    %cst_33 = arith.constant 0.000000e+00 : f32
    %48 = vector.broadcast %cst_33 : f32 to vector<8x128xf32>
    %49 = arith.subf %48, %47 : vector<8x128xf32>
    %50 = math.exp %49 : vector<8x128xf32>
    %51 = math.log1p %50 : vector<8x128xf32>
    %52 = arith.addf %46, %51 : vector<8x128xf32>
    %cst_34 = arith.constant 7.55484343 : f32
    %53 = vector.broadcast %cst_34 : f32 to vector<8x128xf32>
    %54 = arith.mulf %53, %52 : vector<8x128xf32>
    %cst_35 = arith.constant -1.57913542 : f32
    %55 = vector.broadcast %cst_35 : f32 to vector<8x128xf32>
    %56 = arith.addf %54, %55 : vector<8x128xf32>
    %57 = math.exp %56 : vector<8x128xf32>
    %58 = arith.select %34, %57, %42 : vector<8x128xi1>, vector<8x128xf32>
    %c0_36 = arith.constant 0 : index
    %c0_37 = arith.constant 0 : index
    %59 = vector.load %arg4[%c0_36, %c0_37] : memref<8x128xf32, #tpu.memory_space<vmem>>, vector<8x128xf32>
    tpu.vector_store %arg4[%c0_36, %c0_37], %58 {strides = array<i32>} : memref<8x128xf32, #tpu.memory_space<vmem>>, vector<8x128xf32>,
    return
  }
  func.func @transform_0(%arg0: i32) -> (i32, i32) {
    %c0_i32 = arith.constant 0 : i32
    %c0_i32_0 = arith.constant 0 : i32
    return %arg0, %c0_i32 : i32, i32
  }
  func.func @transform_1(%arg0: i32) -> (i32, i32, i32) {
    %c0_i32 = arith.constant 0 : i32
    %c0_i32_0 = arith.constant 0 : i32
    %c0_i32_1 = arith.constant 0 : i32
    %c0_i32_2 = arith.constant 0 : i32
    return %c0_i32, %c0_i32_0, %c0_i32_1 : i32, i32, i32
  }
  func.func @transform_2(%arg0: i32) -> (i32, i32, i32) {
    %c0_i32 = arith.constant 0 : i32
    %c0_i32_0 = arith.constant 0 : i32
    %c0_i32_1 = arith.constant 0 : i32
    %c0_i32_2 = arith.constant 0 : i32
    return %c0_i32, %c0_i32_0, %c0_i32_1 : i32, i32, i32
  }
  func.func @transform_3(%arg0: i32) -> (i32, i32) {
    %c0_i32 = arith.constant 0 : i32
    %c0_i32_0 = arith.constant 0 : i32
    return %arg0, %c0_i32 : i32, i32
  }
}

</mosaic_0001>

<llo_original>
// kernel: tpu_custom_call.1
$region0: #{tpu_custom_call.1}
  #allocation0 [shape = 'u32[]', space=smem, size = 0x4, offset = 0x4, fixed_abs, tag = 'smem constant byte address 0x4 - core index']
  #allocation1 [shape = 'u32[144,128]{1,0:T(1,128)}', space=vmem, size = 0x12000, scoped, tag = 'internal scratch']
  #allocation2 [shape = 'f32[8,128]{1,0:T(8,128)}', space=vmem, size = 0x1000, scoped, tag = 'scratch operand']
  %s0 = inlined_call_operand.hbm [shape: f32[8,10], index: 0, kind: input, shape index: {}]
  %s1 = inlined_call_operand.hbm [shape: f32[3,128,128], index: 1, kind: input, shape index: {}]
  %s2 = inlined_call_operand.vmem [shape: f32[3,1,128], index: 2, kind: input, shape index: {}]
  %s3 = inlined_call_operand.hbm [shape: f32[8,128], index: 3, kind: output, shape index: {}]
  %s4 = sld [smem:[#allocation0]]
  $region30: #{tpu_custom_call.1} parent=0
    _
  %s6 = ssub.s32 1, %s4
  %s7 = scalar_select 0, %s6, %s4
  $region1: #{tpu_custom_call.1} parent=0
    #allocation3 [shape = 'u8[4096]{0}', space=vmem, size = 0x1000, scoped, tag = 'input window, operand 0, single buffered']
    #allocation4 [shape = 's32[1]{0}', space=sflag, size = 0x4, scoped, tag = 'scoped memory for tpu_custom_call.1']
    #allocation5 [shape = 's32[1]{0}', space=sflag, size = 0x4, scoped, tag = 'scoped memory for tpu_custom_call.1']
    #allocation6 [shape = 'u8[196608]{0}', space=vmem, size = 0x30000, scoped, tag = 'input window, operand 1, single buffered']
    #allocation7 [shape = 's32[1]{0}', space=sflag, size = 0x4, scoped, tag = 'scoped memory for tpu_custom_call.1']
    #allocation8 [shape = 'u8[4096]{0}', space=vmem, size = 0x1000, scoped, tag = 'output window, operand 0, single buffered']
    %8 = vsyncpa [#allocation4], 0
    %9 = vsyncpa [#allocation7], 0
    %10 = vsyncpa [#allocation5], 0
    // Predicated region
    $region2: #{tpu_custom_call.1} parent=1 // pred_check
      _
    $region3: #{tpu_custom_call.1} parent=1 // pred_check_branch
      %12 = sbr.rel (0) target = $region5
    $region4: #{tpu_custom_call.1} parent=1 // pred_region
      %s14 = ssub.s32 128, 128
      %15 = vsyncadd [#allocation4], %s14
      %s17 = sshll.u32 [#allocation3], 4
      %s18 = int_to_ptr.vmem [resolvable:$true] %s17
      %20 = dma.hbm_to_vmem [thread:$0]  %s0, 128, %s18, [#allocation4]
    $region5: #{tpu_custom_call.1} parent=1 // pred_fallthru
      _
    // Predicated region
    $region6: #{tpu_custom_call.1} parent=1 // pred_check
      _
    $region7: #{tpu_custom_call.1} parent=1 // pred_check_branch
      %22 = sbr.rel (0) target = $region9
    $region8: #{tpu_custom_call.1} parent=1 // pred_region
      %s24 = ssub.s32 6144, 6144
      %25 = vsyncadd [#allocation7], %s24
      %s26 = sshll.u32 [#allocation6], 4
      %s27 = int_to_ptr.vmem [resolvable:$true] %s26
      %32 = dma.hbm_to_vmem [thread:$0]  %s1, 6144, %s27, [#allocation7], 128, 128, 8
    $region9: #{tpu_custom_call.1} parent=1 // pred_fallthru
      _
    // Predicated region
    $region10: #{tpu_custom_call.1} parent=1 // pred_check
      _
    $region11: #{tpu_custom_call.1} parent=1 // pred_check_branch
      %34 = sbr.rel (0) target = $region13
    $region12: #{tpu_custom_call.1} parent=1 // pred_region
      _
    $region13: #{tpu_custom_call.1} parent=1 // pred_fallthru
      _
    // Predicated region
    $region14: #{tpu_custom_call.1} parent=1 // pred_check
      _
    $region15: #{tpu_custom_call.1} parent=1 // pred_check_branch
      %36 = sbr.rel (0) target = $region17
    $region16: #{tpu_custom_call.1} parent=1 // pred_region
      %37 = dma.done [#allocation4], 128
    $region17: #{tpu_custom_call.1} parent=1 // pred_fallthru
      _
    // Predicated region
    $region18: #{tpu_custom_call.1} parent=1 // pred_check
      _
    $region19: #{tpu_custom_call.1} parent=1 // pred_check_branch
      %39 = sbr.rel (0) target = $region21
    $region20: #{tpu_custom_call.1} parent=1 // pred_region
      %40 = dma.done [#allocation7], 6144
    $region21: #{tpu_custom_call.1} parent=1 // pred_fallthru
      _
    %41 = vst [vmem:[#allocation2] sm:$0xff] 0.0
    %v42 = vld [vmem:[#allocation3] sm:$0xff]
    %vm43 = vcmask 80896
    %44 = vst.msk [vmem:[#allocation2] sm:$0xff] %vm43, %v42
    %v45 = vld [vmem:[#allocation2] sm:$0xff]
    %v46 = vld [vmem:[#allocation6] sm:$0xff]
    %v47 = vld [vmem:[#allocation6 + $0x8] sm:$0xff]
    %v48 = vld [vmem:[#allocation6 + $0x10] sm:$0xff]
    %v49 = vld [vmem:[#allocation6 + $0x18] sm:$0xff]
    %v50 = vld [vmem:[#allocation6 + $0x20] sm:$0xff]
    %v51 = vld [vmem:[#allocation6 + $0x28] sm:$0xff]
    %v52 = vld [vmem:[#allocation6 + $0x30] sm:$0xff]
    %v53 = vld [vmem:[#allocation6 + $0x38] sm:$0xff]
    %v54 = vld [vmem:[#allocation6 + $0x40] sm:$0xff]
    %v55 = vld [vmem:[#allocation6 + $0x48] sm:$0xff]
    %v56 = vld [vmem:[#allocation6 + $0x50] sm:$0xff]
    %v57 = vld [vmem:[#allocation6 + $0x58] sm:$0xff]
    %v58 = vld [vmem:[#allocation6 + $0x60] sm:$0xff]
    %v59 = vld [vmem:[#allocation6 + $0x68] sm:$0xff]
    %v60 = vld [vmem:[#allocation6 + $0x70] sm:$0xff]
    %v61 = vld [vmem:[#allocation6 + $0x78] sm:$0xff]
    %v62 = vld [vmem:[%s2] sm:$0x1]
    %v64 = vlaneseq
    %v65 = vshrl.u32 %v64, 7
    %v66 = vsub.s32 0, %v65
    %v67 = vrot.slane %v62, %v66
    %69 = vmatprep.subr.mxu0 0.0
    %70 = vmatpush1.msra.mxu0 %v46
    %71 = vmatprep.subr.mxu0 0.0
    %72 = vmatpush1.msra.mxu0 %v47
    %73 = vmatprep.subr.mxu0 0.0
    %74 = vmatpush1.msra.mxu0 %v48
    %75 = vmatprep.subr.mxu0 0.0
    %76 = vmatpush1.msra.mxu0 %v49
    %77 = vmatprep.subr.mxu0 0.0
    %78 = vmatpush1.msra.mxu0 %v50
    %79 = vmatprep.subr.mxu0 0.0
    %80 = vmatpush1.msra.mxu0 %v51
    %81 = vmatprep.subr.mxu0 0.0
    %82 = vmatpush1.msra.mxu0 %v52
    %83 = vmatprep.subr.mxu0 0.0
    %84 = vmatpush1.msra.mxu0 %v53
    %85 = vmatprep.subr.mxu0 0.0
    %86 = vmatpush1.msra.mxu0 %v54
    %87 = vmatprep.subr.mxu0 0.0
    %88 = vmatpush1.msra.mxu0 %v55
    %89 = vmatprep.subr.mxu0 0.0
    %90 = vmatpush1.msra.mxu0 %v56
    %91 = vmatprep.subr.mxu0 0.0
    %92 = vmatpush1.msra.mxu0 %v57
    %93 = vmatprep.subr.mxu0 0.0
    %94 = vmatpush1.msra.mxu0 %v58
    %95 = vmatprep.subr.mxu0 0.0
    %96 = vmatpush1.msra.mxu0 %v59
    %97 = vmatprep.subr.mxu0 0.0
    %98 = vmatpush1.msra.mxu0 %v60
    %99 = vmatprep.subr.mxu0 0.0
    %100 = vmatpush1.msra.mxu0 %v61
    %101 = vmatprep.subr.mxu0 0.0
    %102 = vmatpush1.msra.mxu0 0.0
    %103 = vmatprep.subr.mxu0 0.0
    %104 = vmatpush1.msra.mxu0 0.0
    %105 = vmatprep.subr.mxu0 0.0
    %106 = vmatpush1.msra.mxu0 0.0
    %107 = vmatprep.subr.mxu0 0.0
    %108 = vmatpush1.msra.mxu0 0.0
    %109 = vmatprep.subr.mxu0 0.0
    %110 = vmatpush1.msra.mxu0 0.0
    %111 = vmatprep.subr.mxu0 0.0
    %112 = vmatpush1.msra.mxu0 0.0
    %113 = vmatprep.subr.mxu0 0.0
    %114 = vmatpush1.msra.mxu0 0.0
    %115 = vmatprep.subr.mxu0 0.0
    %116 = vmatpush1.msra.mxu0 0.0
    %117 = vmatprep.subr.mxu0 0.0
    %118 = vmatpush1.msra.mxu0 0.0
    %119 = vmatprep.subr.mxu0 0.0
    %120 = vmatpush1.msra.mxu0 0.0
    %121 = vmatprep.subr.mxu0 0.0
    %122 = vmatpush1.msra.mxu0 0.0
    %123 = vmatprep.subr.mxu0 0.0
    %124 = vmatpush1.msra.mxu0 0.0
    %125 = vmatprep.subr.mxu0 0.0
    %126 = vmatpush1.msra.mxu0 0.0
    %127 = vmatprep.subr.mxu0 0.0
    %128 = vmatpush1.msra.mxu0 0.0
    %129 = vmatprep.subr.mxu0 0.0
    %130 = vmatpush1.msra.mxu0 0.0
    %131 = vmatprep.subr.mxu0 0.0
    %132 = vmatpush1.msra.mxu0 0.0
    %133 = vmatprep.mubr.f32.mxu0 0.0
    %134 = vmatmul.mubr.f32.gmra.mrb[0].mxu0 %v45
    %v135 = vpop.f32.mrb[0].mxu0
    %v136 = vadd.f32 %v67, %v135
    %v137 = vpop.f32.mrb[0].mxu0
    %138 = vdwg.mxu0
    %v139 = vmax.f32 %v136, 0.0
    %s140 = scalar_lea.vmem [#allocation6], 128
    %v141 = vld [vmem:[%s140] sm:$0xff]
    %v142 = vld [vmem:[%s140 + $0x8] sm:$0xff]
    %v143 = vld [vmem:[%s140 + $0x10] sm:$0xff]
    %v144 = vld [vmem:[%s140 + $0x18] sm:$0xff]
    %v145 = vld [vmem:[%s140 + $0x20] sm:$0xff]
    %v146 = vld [vmem:[%s140 + $0x28] sm:$0xff]
    %v147 = vld [vmem:[%s140 + $0x30] sm:$0xff]
    %v148 = vld [vmem:[%s140 + $0x38] sm:$0xff]
    %v149 = vld [vmem:[%s140 + $0x40] sm:$0xff]
    %v150 = vld [vmem:[%s140 + $0x48] sm:$0xff]
    %v151 = vld [vmem:[%s140 + $0x50] sm:$0xff]
    %v152 = vld [vmem:[%s140 + $0x58] sm:$0xff]
    %v153 = vld [vmem:[%s140 + $0x60] sm:$0xff]
    %v154 = vld [vmem:[%s140 + $0x68] sm:$0xff]
    %v155 = vld [vmem:[%s140 + $0x70] sm:$0xff]
    %v156 = vld [vmem:[%s140 + $0x78] sm:$0xff]
    %s157 = scalar_lea.vmem %s2, 1
    %v158 = vld [vmem:[%s157] sm:$0x1]
    %v160 = vlaneseq
    %v161 = vshrl.u32 %v160, 7
    %v162 = vsub.s32 0, %v161
    %v163 = vrot.slane %v158, %v162
    %165 = vmatprep.subr.mxu0 0.0
    %166 = vmatpush1.msra.mxu0 %v141
    %167 = vmatprep.subr.mxu0 0.0
    %168 = vmatpush1.msra.mxu0 %v142
    %169 = vmatprep.subr.mxu0 0.0
    %170 = vmatpush1.msra.mxu0 %v143
    %171 = vmatprep.subr.mxu0 0.0
    %172 = vmatpush1.msra.mxu0 %v144
    %173 = vmatprep.subr.mxu0 0.0
    %174 = vmatpush1.msra.mxu0 %v145
    %175 = vmatprep.subr.mxu0 0.0
    %176 = vmatpush1.msra.mxu0 %v146
    %177 = vmatprep.subr.mxu0 0.0
    %178 = vmatpush1.msra.mxu0 %v147
    %179 = vmatprep.subr.mxu0 0.0
    %180 = vmatpush1.msra.mxu0 %v148
    %181 = vmatprep.subr.mxu0 0.0
    %182 = vmatpush1.msra.mxu0 %v149
    %183 = vmatprep.subr.mxu0 0.0
    %184 = vmatpush1.msra.mxu0 %v150
    %185 = vmatprep.subr.mxu0 0.0
    %186 = vmatpush1.msra.mxu0 %v151
    %187 = vmatprep.subr.mxu0 0.0
    %188 = vmatpush1.msra.mxu0 %v152
    %189 = vmatprep.subr.mxu0 0.0
    %190 = vmatpush1.msra.mxu0 %v153
    %191 = vmatprep.subr.mxu0 0.0
    %192 = vmatpush1.msra.mxu0 %v154
    %193 = vmatprep.subr.mxu0 0.0
    %194 = vmatpush1.msra.mxu0 %v155
    %195 = vmatprep.subr.mxu0 0.0
    %196 = vmatpush1.msra.mxu0 %v156
    %197 = vmatprep.subr.mxu0 0.0
    %198 = vmatpush1.msra.mxu0 0.0
    %199 = vmatprep.subr.mxu0 0.0
    %200 = vmatpush1.msra.mxu0 0.0
    %201 = vmatprep.subr.mxu0 0.0
    %202 = vmatpush1.msra.mxu0 0.0
    %203 = vmatprep.subr.mxu0 0.0
    %204 = vmatpush1.msra.mxu0 0.0
    %205 = vmatprep.subr.mxu0 0.0
    %206 = vmatpush1.msra.mxu0 0.0
    %207 = vmatprep.subr.mxu0 0.0
    %208 = vmatpush1.msra.mxu0 0.0
    %209 = vmatprep.subr.mxu0 0.0
    %210 = vmatpush1.msra.mxu0 0.0
    %211 = vmatprep.subr.mxu0 0.0
    %212 = vmatpush1.msra.mxu0 0.0
    %213 = vmatprep.subr.mxu0 0.0
    %214 = vmatpush1.msra.mxu0 0.0
    %215 = vmatprep.subr.mxu0 0.0
    %216 = vmatpush1.msra.mxu0 0.0
    %217 = vmatprep.subr.mxu0 0.0
    %218 = vmatpush1.msra.mxu0 0.0
    %219 = vmatprep.subr.mxu0 0.0
    %220 = vmatpush1.msra.mxu0 0.0
    %221 = vmatprep.subr.mxu0 0.0
    %222 = vmatpush1.msra.mxu0 0.0
    %223 = vmatprep.subr.mxu0 0.0
    %224 = vmatpush1.msra.mxu0 0.0
    %225 = vmatprep.subr.mxu0 0.0
    %226 = vmatpush1.msra.mxu0 0.0
    %227 = vmatprep.subr.mxu0 0.0
    %228 = vmatpush1.msra.mxu0 0.0
    %229 = vmatprep.mubr.f32.mxu0 0.0
    %230 = vmatmul.mubr.f32.gmra.mrb[0].mxu0 %v139
    %v231 = vpop.f32.mrb[0].mxu0
    %v232 = vadd.f32 %v163, %v231
    %v233 = vpop.f32.mrb[0].mxu0
    %234 = vdwg.mxu0
    %v235 = vmax.f32 %v232, 0.0
    %s236 = scalar_lea.vmem [#allocation6], 256
    %v237 = vld [vmem:[%s236] sm:$0xff]
    %v238 = vld [vmem:[%s236 + $0x8] sm:$0xff]
    %v239 = vld [vmem:[%s236 + $0x10] sm:$0xff]
    %v240 = vld [vmem:[%s236 + $0x18] sm:$0xff]
    %v241 = vld [vmem:[%s236 + $0x20] sm:$0xff]
    %v242 = vld [vmem:[%s236 + $0x28] sm:$0xff]
    %v243 = vld [vmem:[%s236 + $0x30] sm:$0xff]
    %v244 = vld [vmem:[%s236 + $0x38] sm:$0xff]
    %v245 = vld [vmem:[%s236 + $0x40] sm:$0xff]
    %v246 = vld [vmem:[%s236 + $0x48] sm:$0xff]
    %v247 = vld [vmem:[%s236 + $0x50] sm:$0xff]
    %v248 = vld [vmem:[%s236 + $0x58] sm:$0xff]
    %v249 = vld [vmem:[%s236 + $0x60] sm:$0xff]
    %v250 = vld [vmem:[%s236 + $0x68] sm:$0xff]
    %v251 = vld [vmem:[%s236 + $0x70] sm:$0xff]
    %v252 = vld [vmem:[%s236 + $0x78] sm:$0xff]
    %s253 = scalar_lea.vmem %s2, 2
    %v254 = vld [vmem:[%s253] sm:$0x1]
    %v256 = vlaneseq
    %v257 = vshrl.u32 %v256, 7
    %v258 = vsub.s32 0, %v257
    %v259 = vrot.slane %v254, %v258
    %261 = vmatprep.subr.mxu0 0.0
    %262 = vmatpush1.msra.mxu0 %v237
    %263 = vmatprep.subr.mxu0 0.0
    %264 = vmatpush1.msra.mxu0 %v238
    %265 = vmatprep.subr.mxu0 0.0
    %266 = vmatpush1.msra.mxu0 %v239
    %267 = vmatprep.subr.mxu0 0.0
    %268 = vmatpush1.msra.mxu0 %v240
    %269 = vmatprep.subr.mxu0 0.0
    %270 = vmatpush1.msra.mxu0 %v241
    %271 = vmatprep.subr.mxu0 0.0
    %272 = vmatpush1.msra.mxu0 %v242
    %273 = vmatprep.subr.mxu0 0.0
    %274 = vmatpush1.msra.mxu0 %v243
    %275 = vmatprep.subr.mxu0 0.0
    %276 = vmatpush1.msra.mxu0 %v244
    %277 = vmatprep.subr.mxu0 0.0
    %278 = vmatpush1.msra.mxu0 %v245
    %279 = vmatprep.subr.mxu0 0.0
    %280 = vmatpush1.msra.mxu0 %v246
    %281 = vmatprep.subr.mxu0 0.0
    %282 = vmatpush1.msra.mxu0 %v247
    %283 = vmatprep.subr.mxu0 0.0
    %284 = vmatpush1.msra.mxu0 %v248
    %285 = vmatprep.subr.mxu0 0.0
    %286 = vmatpush1.msra.mxu0 %v249
    %287 = vmatprep.subr.mxu0 0.0
    %288 = vmatpush1.msra.mxu0 %v250
    %289 = vmatprep.subr.mxu0 0.0
    %290 = vmatpush1.msra.mxu0 %v251
    %291 = vmatprep.subr.mxu0 0.0
    %292 = vmatpush1.msra.mxu0 %v252
    %293 = vmatprep.subr.mxu0 0.0
    %294 = vmatpush1.msra.mxu0 0.0
    %295 = vmatprep.subr.mxu0 0.0
    %296 = vmatpush1.msra.mxu0 0.0
    %297 = vmatprep.subr.mxu0 0.0
    %298 = vmatpush1.msra.mxu0 0.0
    %299 = vmatprep.subr.mxu0 0.0
    %300 = vmatpush1.msra.mxu0 0.0
    %301 = vmatprep.subr.mxu0 0.0
    %302 = vmatpush1.msra.mxu0 0.0
    %303 = vmatprep.subr.mxu0 0.0
    %304 = vmatpush1.msra.mxu0 0.0
    %305 = vmatprep.subr.mxu0 0.0
    %306 = vmatpush1.msra.mxu0 0.0
    %307 = vmatprep.subr.mxu0 0.0
    %308 = vmatpush1.msra.mxu0 0.0
    %309 = vmatprep.subr.mxu0 0.0
    %310 = vmatpush1.msra.mxu0 0.0
    %311 = vmatprep.subr.mxu0 0.0
    %312 = vmatpush1.msra.mxu0 0.0
    %313 = vmatprep.subr.mxu0 0.0
    %314 = vmatpush1.msra.mxu0 0.0
    %315 = vmatprep.subr.mxu0 0.0
    %316 = vmatpush1.msra.mxu0 0.0
    %317 = vmatprep.subr.mxu0 0.0
    %318 = vmatpush1.msra.mxu0 0.0
    %319 = vmatprep.subr.mxu0 0.0
    %320 = vmatpush1.msra.mxu0 0.0
    %321 = vmatprep.subr.mxu0 0.0
    %322 = vmatpush1.msra.mxu0 0.0
    %323 = vmatprep.subr.mxu0 0.0
    %324 = vmatpush1.msra.mxu0 0.0
    %325 = vmatprep.mubr.f32.mxu0 0.0
    %326 = vmatmul.mubr.f32.gmra.mrb[0].mxu0 %v235
    %v327 = vpop.f32.mrb[0].mxu0
    %v328 = vadd.f32 %v259, %v327
    %v329 = vpop.f32.mrb[0].mxu0
    %330 = vdwg.mxu0
    %v331 = vlaneseq
    %v332 = vand.u32 %v331, 127
    %vm333 = vcmp.lt.s32.totalorder %v332, 2
    %vm334 = vcmp.eq.s32.totalorder %v332, 2
    %v335 = vsel %vm333, %v328, 0.0
    %v336 = vmul.f32 %v335, %v335
    %337 = vadd.xlane.f32.xlu0 %v336
    %v338 = vpop.xlane.xlu0 %337
    %v339 = vrsqrt.pop %v338
    %v340 = vmul.f32 %v335, %v339
    %v341 = vsel %vm334, %v328, 0.0
    %v342 = vmax.f32 %v341, 0.0
    %v343 = vand.u32 2147483647, %v341
    %v344 = vsub.f32 0.0, %v343
    %v345 = vmul.f32 %v344, 1.442695
    %v346 = vpow.pop %v345
    %v347 = vadd.f32 %v346, 1.0
    %v348 = vlog2.pop %v347
    %v349 = vmul.f32 %v348, 0.6931472
    %v350 = vmul.f32 -0.5, %v346
    %v351 = vadd.f32 %v350, 1.0
    %v352 = vmul.f32 %v351, %v346
    %v353 = vand.u32 2147483647, %v346
    %vm354 = vcmp.lt.f32.partialorder %v353, 0.0004427343
    %v355 = vsel %vm354, %v352, %v349
    %v356 = vadd.f32 %v342, %v355
    %v357 = vmul.f32 %v356, 7.5548434
    %v358 = vadd.f32 %v357, -1.5791354
    %v359 = vmul.f32 %v358, 1.442695
    %v360 = vpow.pop %v359
    %v361 = vsel %vm334, %v360, %v340
    %362 = vst [vmem:[#allocation8] sm:$0xff] %v361
    // Predicated region
    $region22: #{tpu_custom_call.1} parent=1 // pred_check
      _
    $region23: #{tpu_custom_call.1} parent=1 // pred_check_branch
      %364 = sbr.rel (0) target = $region25
    $region24: #{tpu_custom_call.1} parent=1 // pred_region
      %s366 = ssub.s32 128, 128
      %367 = vsyncadd [#allocation5], %s366
      %s369 = sshll.u32 [#allocation8], 4
      %s370 = int_to_ptr.vmem [resolvable:$true] %s369
      %372 = dma.vmem_to_hbm [thread:$0]  %s370, 128, %s3, [#allocation5]
    $region25: #{tpu_custom_call.1} parent=1 // pred_fallthru
      _
    // Predicated region
    $region26: #{tpu_custom_call.1} parent=1 // pred_check
      _
    $region27: #{tpu_custom_call.1} parent=1 // pred_check_branch
      %374 = sbr.rel (0) target = $region29
    $region28: #{tpu_custom_call.1} parent=1 // pred_region
      %375 = dma.done [#allocation5], 128
    $region29: #{tpu_custom_call.1} parent=1 // pred_fallthru
      _
    %376 = vsyncpa [#allocation4], 1
    %377 = vsyncpa [#allocation7], 1
    %378 = vsyncpa [#allocation5], 1

</llo_original>
